<compile_context>
chip_gen: v7x
topology: tpu7x:2x2x1
jax: 0.10.0
libtpu: 0.0.40
codegen_flags: <defaults>
</compile_context>

<pallas_src>
import functools

import jax
import jax.numpy as jnp
from jax.experimental import pallas as pl
from jax.experimental.pallas import tpu as pltpu


# --------------------------------------------------------------------------
# Ball query — plain JAX glue.
# TODO(synk): ball_query_cuda2 is an external CUDA op in the original; its
# "first-k-in-ball, pad-with-first" semantics are reproduced here in O(n^2) JAX.
# --------------------------------------------------------------------------
def ball_query_indices(pos, radius, k):
    """pos: (b, n, 3) -> neighbour indices (b, n, k) int32."""
    b, n, _ = pos.shape
    d2 = jnp.sum((pos[:, :, None, :] - pos[:, None, :, :]) ** 2, axis=-1)
    in_ball = d2 < radius * radius
    order_key = jnp.where(in_ball, 0, n) + jnp.arange(n)[None, None, :]
    idx = jnp.argsort(order_key, axis=-1)[:, :, :k]                # (b, n, k)
    valid = jnp.take_along_axis(in_ball, idx, axis=-1)
    idx = jnp.where(valid, idx, idx[:, :, :1])                     # pad w/ first hit
    return idx.astype(jnp.int32)


def ball_query_group(pos, feat, radius, k):
    """Reference-path grouping: (b, n, 3), (b, n, c) -> (b, 3+c, k, n)."""
    idx = ball_query_indices(pos, radius, k)
    gp = jax.vmap(lambda p, i: p[i])(pos, idx)                     # (b, n, k, 3)
    gf = jax.vmap(lambda f_, i: f_[i])(feat, idx)                  # (b, n, k, c)
    rel = (gp - pos[:, :, None, :]) / radius
    grouped = jnp.concatenate([rel, gf], axis=-1)                  # (b, n, k, 3+c)
    return jnp.transpose(grouped, (0, 3, 2, 1))                    # (b, 3+c, k, n)


# --------------------------------------------------------------------------
# Kernel A: per-point lba1 embedding  g = W1x_f @ feat + W1p_f @ pos/r.
# --------------------------------------------------------------------------
def _point_embed_kernel(feat_ref, pos_ref, w1x_ref, w1p_ref, g_ref):
    acc = jnp.dot(w1x_ref[...], feat_ref[...], preferred_element_type=jnp.float32)
    acc += jnp.dot(w1p_ref[...], pos_ref[...], preferred_element_type=jnp.float32)
    g_ref[...] = acc.astype(g_ref.dtype)


# --------------------------------------------------------------------------
# Kernel B: streamed max over k neighbours -> BN1 shift + ReLU -> lba2
# (expand conv + BN + ReLU + project conv + BN) -> residual add -> ReLU.
# --------------------------------------------------------------------------
def _invres_kernel(g_ref, pos_ref, x_ref,
                   w1p_ref, b1_ref, w2_ref, b2_ref, w3_ref, b3_ref,
                   out_ref, *, k):
    # g_ref: (k, c, tile_n)  pos_ref: (8, tile_n)  x_ref/out_ref: (c, tile_n)

    # Streamed max over neighbour slabs: only 2 (c, tile_n) slabs live at once.
    m = g_ref[0]
    for j in range(1, k):
        m = jnp.maximum(m, g_ref[j])
    m = m.astype(jnp.float32)

    # lba1 epilogue: subtract centre-point position term, BN shift, ReLU.
    w1p = w1p_ref[...]
    yp = jnp.dot(w1p, pos_ref[...], preferred_element_type=jnp.float32)
    f = jnp.maximum(m - yp + b1_ref[...], 0.0)                     # (c, tile_n) f32

    # lba2: expand 1x1 conv + BN + ReLU, then project 1x1 conv + BN.
    w2 = w2_ref[...]
    w3 = w3_ref[...]
    h1 = jnp.dot(w2, f.astype(w2.dtype), preferred_element_type=jnp.float32)
    h1 = jnp.maximum(h1 + b2_ref[...], 0.0)                        # (4c, tile_n)
    h2 = jnp.dot(w3, h1.astype(w3.dtype), preferred_element_type=jnp.float32)
    h2 = h2 + b3_ref[...]                                          # (c, tile_n)

    # residual + ReLU (f32 math, cast only on the final store).
    out_ref[...] = jnp.maximum(x_ref[...].astype(jnp.float32) + h2,
                               0.0).astype(out_ref.dtype)


# --------------------------------------------------------------------------
# VMEM-aware tiling.
# --------------------------------------------------------------------------
def _vmem_capacity_bytes():
    try:
        cap = int(pltpu.get_tpu_info().vmem_capacity_bytes)
        if cap > 0:
            return cap
    except Exception:
        pass
    return 64 * 2 ** 20  # conservative default (v7x-sized)


def _pick_tile_n(n, b, c, k, itemsize, vmem_cap):
    """Largest tile that fits the per-step footprint (blocks + f32 intermediates)."""
    budget = int(0.5 * vmem_cap)

    def step_bytes(t):
        blocks = 2 * t * (k * c * itemsize      # gathered neighbour slab (dominant)
                          + 8 * itemsize        # padded positions
                          + c * itemsize        # residual input
                          + c * itemsize)       # output
        inter = t * c * (2 + 4 + 1) * 4         # running max / f, h1, h2 in f32
        return blocks + inter

    candidates = [t for t in (4096, 2048, 1024, 512, 256, 128) if n % t == 0]
    if not candidates:
        return n                                 # small / irregular n: one block
    feasible = [t for t in candidates if step_bytes(t) <= budget]
    if not feasible:
        return candidates[-1]
    for t in feasible:                           # largest first
        if b * (n // t) >= 2:                    # keep >= 2 grid cells (v7x: 2 TCs)
            return t
    return feasible[0]


# --------------------------------------------------------------------------
# Forward wrapper.
# --------------------------------------------------------------------------
def invresmlp_forward(pos, x, params, radius, k, *, compute_dtype=jnp.bfloat16):
    """pos: (b, n, 3), x: (b, n, c) -> (pos, (b, n, c))."""
    b, n, c = x.shape
    c4 = 4 * c
    it = jnp.dtype(compute_dtype).itemsize

    (w1, s1, sh1, w2, s2, sh2, w3, s3, sh3) = params

    # Fold BN scales into the conv weights; split W1 into position/feature parts
    # (columns [0:3] multiply the relative positions, [3:] the features).
    w1f = s1[:, None] * w1                                     # (c, 3+c) f32
    w1p = jnp.pad(w1f[:, :3], ((0, 0), (0, 5))).astype(compute_dtype)   # (c, 8)
    w1x = w1f[:, 3:].astype(compute_dtype)                     # (c, c)
    w2f = (s2[:, None] * w2).astype(compute_dtype)             # (4c, c)
    w3f = (s3[:, None] * w3).astype(compute_dtype)             # (c, 4c)
    b1c = sh1[:, None].astype(jnp.float32)                     # (c, 1)
    b2c = sh2[:, None].astype(jnp.float32)                     # (4c, 1)
    b3c = sh3[:, None].astype(jnp.float32)                     # (c, 1)

    # Channel-major per-point inputs (small, no k duplication).
    x_cm = jnp.transpose(x, (0, 2, 1)).astype(compute_dtype)   # (b, c, n)
    pos_cm = jnp.transpose(pos, (0, 2, 1)) / radius            # (b, 3, n)
    pos_cm = jnp.pad(pos_cm, ((0, 0), (0, 5), (0, 0))).astype(compute_dtype)  # (b, 8, n)

    vmem_cap = _vmem_capacity_bytes()
    vmem_limit = max(32 * 2 ** 20, int(0.85 * vmem_cap))       # per-generation cap
    tile_n = _pick_tile_n(n, b, c, k, it, vmem_cap)
    assert n % tile_n == 0
    n_tiles = n // tile_n

    cparams = pltpu.CompilerParams(
        dimension_semantics=("parallel", "parallel"),
        vmem_limit_bytes=vmem_limit)

    full2d = lambda shape: pl.BlockSpec(shape, lambda i, j: (0, 0))

    # ---- Kernel A: per-point lba1 embedding g -----------------------------
    g_cm = pl.pallas_call(
        _point_embed_kernel,
        out_shape=jax.ShapeDtypeStruct((b, c, n), compute_dtype),
        grid=(b, n_tiles),
        in_specs=[
            pl.BlockSpec((None, c, tile_n), lambda i, j: (i, 0, j)),   # features
            pl.BlockSpec((None, 8, tile_n), lambda i, j: (i, 0, j)),   # pos / r (padded)
            full2d((c, c)),                                            # W1 feature part
            full2d((c, 8)),                                            # W1 position part
        ],
        out_specs=pl.BlockSpec((None, c, tile_n), lambda i, j: (i, 0, j)),
        compiler_params=cparams,
        cost_estimate=pl.CostEstimate(
            flops=int(2 * b * n * c * (c + 8)),
            transcendentals=0,
            bytes_accessed=int(b * n * (2 * c + 8) * it + (c * c + c * 8) * it)),
    )(x_cm, pos_cm, w1x, w1p)

    # ---- Neighbour gather (single XLA gather, directly in (b, k, c, n)) ---
    # TODO(synk): move this gather inside the kernel (scalar-prefetched index
    # table + DMA gather from a VMEM-resident table) once Pallas TPU supports
    # an efficient arbitrary row-gather.
    idx = ball_query_indices(pos, radius, k)                    # (b, n, k)
    idx_t = jnp.transpose(idx, (0, 2, 1))                       # (b, k, n)
    gather_cols = jax.vmap(jax.vmap(lambda gb, row: jnp.take(gb, row, axis=1),
                                    in_axes=(None, 0)), in_axes=(0, 0))
    g_nb = gather_cols(g_cm, idx_t)                             # (b, k, c, n)

    # ---- Kernel B: max over k + lba1 epilogue + lba2 + residual -----------
    kernel_b = functools.partial(_invres_kernel, k=k)
    flops_b = int(2 * b * n * (8 * c + 2 * c4 * c))
    bytes_b = int(b * n * (k * c + 8 + 2 * c) * it
                  + (c * 8 + 2 * c4 * c) * it + (2 * c + c4) * 4)

    out_cm = pl.pallas_call(
        kernel_b,
        out_shape=jax.ShapeDtypeStruct((b, c, n), compute_dtype),
        grid=(b, n_tiles),
        in_specs=[
            pl.BlockSpec((None, k, c, tile_n), lambda i, j: (i, 0, 0, j)),  # gathered g
            pl.BlockSpec((None, 8, tile_n), lambda i, j: (i, 0, j)),        # pos / r
            pl.BlockSpec((None, c, tile_n), lambda i, j: (i, 0, j)),        # residual x
            full2d((c, 8)),      # W1 position part (BN1 scale folded)
            full2d((c, 1)),      # BN1 shift
            full2d((c4, c)),     # W2 (BN2 scale folded)
            full2d((c4, 1)),     # BN2 shift
            full2d((c, c4)),     # W3 (BN3 scale folded)
            full2d((c, 1)),      # BN3 shift
        ],
        out_specs=pl.BlockSpec((None, c, tile_n), lambda i, j: (i, 0, j)),
        compiler_params=cparams,
        cost_estimate=pl.CostEstimate(
            flops=flops_b, transcendentals=0, bytes_accessed=bytes_b),
    )(g_nb, pos_cm, x_cm, w1p, b1c, w2f, b2c, w3f, b3c)

    out = jnp.transpose(out_cm, (0, 2, 1)).astype(x.dtype)      # (b, n, c)
    return pos, out


# --------------------------------------------------------------------------
# Pure-JAX f32 reference (mirrors the PyTorch module structure).
# --------------------------------------------------------------------------
def reference_forward(pos, x, params, radius, k):
    (w1, s1, sh1, w2, s2, sh2, w3, s3, sh3) = params
    grouped = ball_query_group(pos, x, radius, k)                      # (b,3+c,k,n)
    h = jnp.einsum('oi,bikn->bokn', w1, grouped)
    h = jnp.maximum(h * s1[None, :, None, None] + sh1[None, :, None, None], 0.0)
    f = jnp.max(h, axis=2)                                             # (b, c, n)
    h1 = jnp.einsum('oi,bin->bon', w2, f)
    h1 = jnp.maximum(h1 * s2[None, :, None] + sh2[None, :, None], 0.0)
    h2 = jnp.einsum('oi,bin->bon', w3, h1)
    h2 = h2 * s3[None, :, None] + sh3[None, :, None]
    out = jnp.maximum(jnp.transpose(x, (0, 2, 1)) + h2, 0.0)
    return pos, jnp.transpose(out, (0, 2, 1))


def make_params(key, c):
    cin = c + 3
    eps = 1e-5
    ks = jax.random.split(key, 9)

    def bn(kg, kb, ch):
        gamma = 1.0 + 0.1 * jax.random.normal(kg, (ch,), jnp.float32)
        beta = 0.1 * jax.random.normal(kb, (ch,), jnp.float32)
        scale = gamma / jnp.sqrt(1.0 + eps)        # running_mean=0, running_var=1
        shift = beta
        return scale, shift

    w1 = 0.1 * jax.random.normal(ks[0], (c, cin), jnp.float32)       # Conv2d(cin->c,1)
    s1, sh1 = bn(ks[1], ks[2], c)
    w2 = 0.1 * jax.random.normal(ks[3], (4 * c, c), jnp.float32)     # Conv1d(c->4c,1)
    s2, sh2 = bn(ks[4], ks[5], 4 * c)
    w3 = 0.1 * jax.random.normal(ks[6], (c, 4 * c), jnp.float32)     # Conv1d(4c->c,1)
    s3, sh3 = bn(ks[7], ks[8], c)
    return (w1, s1, sh1, w2, s2, sh2, w3, s3, sh3)


if __name__ == "__main__":
    key = jax.random.PRNGKey(0)
    b, n, c, k_nb = 2, 128, 8, 16
    radius = 0.3

    k_pos, k_x, k_par = jax.random.split(key, 3)
    pos = jax.random.uniform(k_pos, (b, n, 3), jnp.float32)
    x = jax.random.normal(k_x, (b, n, c), jnp.float32)
    params = make_params(k_par, c)

    _, x_ref = reference_forward(pos, x, params, radius, k_nb)

    # f32 compute path: tight check against the pure-JAX reference.
    pos_out, x_f32 = invresmlp_forward(pos, x, params, radius, k_nb,
                                       compute_dtype=jnp.float32)
    jax.block_until_ready(x_f32)
    assert x_f32.shape == (b, n, c)
    assert jnp.allclose(x_f32, x_ref, rtol=1e-4, atol=1e-4), "f32 mismatch vs reference"
    assert jnp.allclose(pos_out, pos)

    # bf16 matmul path (default, fast): looser tolerance for bf16 rounding.
    _, x_bf16 = invresmlp_forward(pos, x, params, radius, k_nb,
                                  compute_dtype=jnp.bfloat16)
    jax.block_until_ready(x_bf16)
    assert x_bf16.shape == (b, n, c)
    assert jnp.allclose(x_bf16, x_ref, rtol=2e-2, atol=2e-2), "bf16 mismatch vs reference"

    print("KERNEL_OK")
</pallas_src>

<mosaic_0001>
module attributes {stable_mosaic.version = 11 : i64} {
  func.func @_point_embed_kernel(%arg0: i32, %arg1: i32, %arg2: memref<1x8x128xf32, #tpu.memory_space<vmem>>, %arg3: memref<1x8x128xf32, #tpu.memory_space<vmem>>, %arg4: memref<8x8xf32, #tpu.memory_space<vmem>>, %arg5: memref<8x8xf32, #tpu.memory_space<vmem>>, %arg6: memref<1x8x128xf32, #tpu.memory_space<vmem>>) attributes {dimension_semantics = [#tpu.dimension_semantics<parallel>, #tpu.dimension_semantics<parallel>], iteration_bounds = array<i64: 2, 1>, scalar_prefetch = 0 : i64, scratch_operands = 0 : i64, tpu.core_type = #tpu.core_type<tc>, window_params = [{transform_indices = @transform_0, window_bounds = array<i64: 1, 8, 128>}, {transform_indices = @transform_1, window_bounds = array<i64: 1, 8, 128>}, {pipeline_mode = #tpu.pipeline_mode<synchronous>, transform_indices = @transform_2, window_bounds = array<i64: 8, 8>}, {pipeline_mode = #tpu.pipeline_mode<synchronous>, transform_indices = @transform_3, window_bounds = array<i64: 8, 8>}, {transform_indices = @transform_4, window_bounds = array<i64: 1, 8, 128>}]} {
    %c0 = arith.constant 0 : index
    %c0_0 = arith.constant 0 : index
    %0 = vector.load %arg4[%c0, %c0_0] : memref<8x8xf32, #tpu.memory_space<vmem>>, vector<8x8xf32>
    %c0_1 = arith.constant 0 : index
    %c0_2 = arith.constant 0 : index
    %c0_3 = arith.constant 0 : index
    %1 = vector.load %arg2[%c0_1, %c0_2, %c0_3] : memref<1x8x128xf32, #tpu.memory_space<vmem>>, vector<1x8x128xf32>
    %2 = vector.shape_cast %1 : vector<1x8x128xf32> to vector<8x128xf32>
    %cst = arith.constant dense<0.000000e+00> : vector<8x128xf32>
    %3 = tpu.matmul %0, %2, %cst {dimension_numbers = #tpu.dot_dimension_numbers<[1], [0], [0], [1], [0, 0, 1, 1], [], []>} : vector<8x8xf32>, vector<8x128xf32>, vector<8x128xf32> -> vector<8x128xf32>
    %c0_4 = arith.constant 0 : index
    %c0_5 = arith.constant 0 : index
    %4 = vector.load %arg5[%c0_4, %c0_5] : memref<8x8xf32, #tpu.memory_space<vmem>>, vector<8x8xf32>
    %c0_6 = arith.constant 0 : index
    %c0_7 = arith.constant 0 : index
    %c0_8 = arith.constant 0 : index
    %5 = vector.load %arg3[%c0_6, %c0_7, %c0_8] : memref<1x8x128xf32, #tpu.memory_space<vmem>>, vector<1x8x128xf32>
    %6 = vector.shape_cast %5 : vector<1x8x128xf32> to vector<8x128xf32>
    %cst_9 = arith.constant dense<0.000000e+00> : vector<8x128xf32>
    %7 = tpu.matmul %4, %6, %cst_9 {dimension_numbers = #tpu.dot_dimension_numbers<[1], [0], [0], [1], [0, 0, 1, 1], [], []>} : vector<8x8xf32>, vector<8x128xf32>, vector<8x128xf32> -> vector<8x128xf32>
    %8 = arith.addf %3, %7 : vector<8x128xf32>
    %c0_10 = arith.constant 0 : index
    %c0_11 = arith.constant 0 : index
    %c0_12 = arith.constant 0 : index
    %9 = vector.load %arg6[%c0_10, %c0_11, %c0_12] : memref<1x8x128xf32, #tpu.memory_space<vmem>>, vector<1x8x128xf32>
    %10 = vector.shape_cast %9 : vector<1x8x128xf32> to vector<8x128xf32>
    %11 = vector.shape_cast %8 : vector<8x128xf32> to vector<1x8x128xf32>
    tpu.vector_store %arg6[%c0_10, %c0_11, %c0_12], %11 {strides = array<i32>} : memref<1x8x128xf32, #tpu.memory_space<vmem>>, vector<1x8x128xf32>,
    return
  }
  func.func @transform_0(%arg0: i32, %arg1: i32) -> (i32, i32, i32) {
    %c0_i32 = arith.constant 0 : i32
    %c0_i32_0 = arith.constant 0 : i32
    return %arg0, %c0_i32, %arg1 : i32, i32, i32
  }
  func.func @transform_1(%arg0: i32, %arg1: i32) -> (i32, i32, i32) {
    %c0_i32 = arith.constant 0 : i32
    %c0_i32_0 = arith.constant 0 : i32
    return %arg0, %c0_i32, %arg1 : i32, i32, i32
  }
  func.func @transform_2(%arg0: i32, %arg1: i32) -> (i32, i32) {
    %c0_i32 = arith.constant 0 : i32
    %c0_i32_0 = arith.constant 0 : i32
    %c0_i32_1 = arith.constant 0 : i32
    return %c0_i32, %c0_i32_0 : i32, i32
  }
  func.func @transform_3(%arg0: i32, %arg1: i32) -> (i32, i32) {
    %c0_i32 = arith.constant 0 : i32
    %c0_i32_0 = arith.constant 0 : i32
    %c0_i32_1 = arith.constant 0 : i32
    return %c0_i32, %c0_i32_0 : i32, i32
  }
  func.func @transform_4(%arg0: i32, %arg1: i32) -> (i32, i32, i32) {
    %c0_i32 = arith.constant 0 : i32
    %c0_i32_0 = arith.constant 0 : i32
    return %arg0, %c0_i32, %arg1 : i32, i32, i32
  }
}

</mosaic_0001>

<llo_original>
// kernel: tpu_custom_call.1
$region0: #{tpu_custom_call.1}
  #allocation0 [shape = 'u32[]', space=smem, size = 0x4, offset = 0x4, fixed_abs, tag = 'smem constant byte address 0x4 - core index']
  #allocation1 [shape = 'u32[144,128]{1,0:T(1,128)}', space=vmem, size = 0x12000, scoped, tag = 'internal scratch']
  %s0 = inlined_call_operand.hbm [shape: f32[2,8,128], index: 0, kind: input, shape index: {}]
  %s1 = inlined_call_operand.hbm [shape: f32[2,8,128], index: 1, kind: input, shape index: {}]
  %s2 = inlined_call_operand.hbm [shape: f32[8,8], index: 2, kind: input, shape index: {}]
  %s3 = inlined_call_operand.vmem [shape: f32[8,8], index: 3, kind: input, shape index: {}]
  %s4 = inlined_call_operand.hbm [shape: f32[2,8,128], index: 4, kind: output, shape index: {}]
  %s5 = sld [smem:[#allocation0]]
  $region61: #{tpu_custom_call.1} parent=0
    _
  %s7 = ssub.s32 1, %s5
  %s8 = scalar_select 0, %s7, %s5
  $region1: #{tpu_custom_call.1} parent=0
    #allocation2 [shape = 'u8[8192]{0}', space=vmem, size = 0x2000, scoped, tag = 'input window, operand 0']
    #allocation3 [shape = 's32[2]{0}', space=sflag, size = 0x8, scoped, tag = 'scoped memory for tpu_custom_call.1']
    #allocation4 [shape = 's32[2]{0}', space=sflag, size = 0x8, scoped, tag = 'scoped memory for tpu_custom_call.1']
    #allocation5 [shape = 'u8[8192]{0}', space=vmem, size = 0x2000, scoped, tag = 'input window, operand 1']
    #allocation6 [shape = 's32[2]{0}', space=sflag, size = 0x8, scoped, tag = 'scoped memory for tpu_custom_call.1']
    #allocation7 [shape = 'u8[4096]{0}', space=vmem, size = 0x1000, scoped, tag = 'input window, operand 2, single buffered']
    #allocation8 [shape = 'u8[8192]{0}', space=vmem, size = 0x2000, scoped, tag = 'output window, operand 0']
    %9 = vsyncpa [#allocation3], 0
    %s10 = scalar_lea.sflag [#allocation3], 1
    %11 = vsyncpa %s10, 0
    %12 = vsyncpa [#allocation6], 0
    %s13 = scalar_lea.sflag [#allocation6], 1
    %14 = vsyncpa %s13, 0
    %15 = vsyncpa [#allocation4], 0
    %s16 = scalar_lea.sflag [#allocation4], 1
    %17 = vsyncpa %s16, 0
    loop: start=0, step=1, limit=4
    $region2: #{tpu_custom_call.1} parent=1 // loop_pre_header
      _
    $region3: #{tpu_custom_call.1} parent=1 // loop_header
      %s19 = sphi 0, %s23
      %p20 = scmp.ge.s32.totalorder %s19, 4
      %s26 = sphi 0, %s38
      %s27 = sphi 0, %s34
      %s28 = sphi 0, %s26
      %s29 = sphi 0, %s27
      %s30 = sphi 0, %s28
      %s31 = sphi 0, %s29
      %s43 = sphi 0, %s45
      %s46 = sphi 0, %s43
      %s47 = sphi 0, %s46
      %s63 = sphi 0, %s47
      %s71 = sphi 0, %s73
      %s74 = sphi 0, %s71
      %s75 = sphi 0, %s74
      %s91 = sphi 0, %s75
      %s95 = sphi 0, %s95
      %s97 = sphi 0, %s95
      %s98 = sphi 0, %s97
      %s112 = sphi 0, %s98
      %s116 = sphi 0, %s116
      %s118 = sphi 0, %s116
      %s119 = sphi 0, %s118
      %s133 = sphi 0, %s119
      %s141 = sphi 0, %s143
      %s144 = sphi 0, %s141
      %s145 = sphi 0, %s144
      %s161 = sphi 0, %s145
    $region4: #{tpu_custom_call.1} parent=1 // loop_header_branch
      %22 = sbr.rel (%p20) target = $region8
    $region5: #{tpu_custom_call.1} parent=1 // loop_body
      %s24 = ssub.s32 %s19, 1
      %s25 = ssub.s32 %s19, 2
      %s32 = sadd.s32 1, %s27
      %p33 = scmp.ge.s32.totalorder %s32, 1
      %s34 = scalar_select %p33, 0, %s32
      %s35 = sadd.s32 1, %s26
      %s36 = scalar_select %p33, %s35, %s26
      %p37 = scmp.ge.s32.totalorder %s36, 2
      %s38 = scalar_select %p37, 0, %s36
      %s39 = ssub.s32 %s26, %s38
      %s40 = ssub.s32 %s27, %s34
      %s41 = sor.u32 %s39, %s40
      %p42 = scmp.eq.s32.totalorder %s41, 0
      %s44 = sadd.s32 %s43, 1
      %s45 = scalar_select %p42, %s43, %s44
      %p48 = pneg %p42
      %p49 = scmp.eq.s32.totalorder %s19, 1
      %p50 = por %p48, %p49
      %p51 = scmp.ne.s32.totalorder %s43, %s46
      %p52 = scmp.eq.s32.totalorder %s19, 0
      %p53 = por %p51, %p52
      %p54 = scmp.ne.s32.totalorder %s43, %s46
      %p55 = scmp.eq.s32.totalorder %s24, 1
      %p56 = por %p54, %p55
      %p57 = scmp.ne.s32.totalorder %s46, %s47
      %p58 = scmp.eq.s32.totalorder %s24, 0
      %p59 = por %p57, %p58
      %p60 = scmp.ne.s32.totalorder %s46, %s47
      %p61 = scmp.eq.s32.totalorder %s25, 1
      %p62 = por %p60, %p61
      %p64 = scmp.ne.s32.totalorder %s47, %s63
      %p65 = scmp.eq.s32.totalorder %s25, 0
      %p66 = por %p64, %p65
      %s67 = ssub.s32 %s26, %s38
      %s68 = ssub.s32 %s27, %s34
      %s69 = sor.u32 %s67, %s68
      %p70 = scmp.eq.s32.totalorder %s69, 0
      %s72 = sadd.s32 %s71, 1
      %s73 = scalar_select %p70, %s71, %s72
      %p76 = pneg %p70
      %p77 = scmp.eq.s32.totalorder %s19, 1
      %p78 = por %p76, %p77
      %p79 = scmp.ne.s32.totalorder %s71, %s74
      %p80 = scmp.eq.s32.totalorder %s19, 0
      %p81 = por %p79, %p80
      %p82 = scmp.ne.s32.totalorder %s71, %s74
      %p83 = scmp.eq.s32.totalorder %s24, 1
      %p84 = por %p82, %p83
      %p85 = scmp.ne.s32.totalorder %s74, %s75
      %p86 = scmp.eq.s32.totalorder %s24, 0
      %p87 = por %p85, %p86
      %p88 = scmp.ne.s32.totalorder %s74, %s75
      %p89 = scmp.eq.s32.totalorder %s25, 1
      %p90 = por %p88, %p89
      %p92 = scmp.ne.s32.totalorder %s75, %s91
      %p93 = scmp.eq.s32.totalorder %s25, 0
      %p94 = por %p92, %p93
      %s96 = sadd.s32 %s95, 1
      %p99 = scmp.eq.s32.totalorder %s19, 1
      %p100 = scmp.ne.s32.totalorder %s95, %s97
      %p101 = scmp.eq.s32.totalorder %s19, 0
      %p102 = por %p100, %p101
      %p103 = scmp.ne.s32.totalorder %s95, %s97
      %p104 = scmp.eq.s32.totalorder %s24, 1
      %p105 = por %p103, %p104
      %p106 = scmp.ne.s32.totalorder %s97, %s98
      %p107 = scmp.eq.s32.totalorder %s24, 0
      %p108 = por %p106, %p107
      %p109 = scmp.ne.s32.totalorder %s97, %s98
      %p110 = scmp.eq.s32.totalorder %s25, 1
      %p111 = por %p109, %p110
      %p113 = scmp.ne.s32.totalorder %s98, %s112
      %p114 = scmp.eq.s32.totalorder %s25, 0
      %p115 = por %p113, %p114
      %s117 = sadd.s32 %s116, 1
      %p120 = scmp.eq.s32.totalorder %s19, 1
      %p121 = scmp.ne.s32.totalorder %s116, %s118
      %p122 = scmp.eq.s32.totalorder %s19, 0
      %p123 = por %p121, %p122
      %p124 = scmp.ne.s32.totalorder %s116, %s118
      %p125 = scmp.eq.s32.totalorder %s24, 1
      %p126 = por %p124, %p125
      %p127 = scmp.ne.s32.totalorder %s118, %s119
      %p128 = scmp.eq.s32.totalorder %s24, 0
      %p129 = por %p127, %p128
      %p130 = scmp.ne.s32.totalorder %s118, %s119
      %p131 = scmp.eq.s32.totalorder %s25, 1
      %p132 = por %p130, %p131
      %p134 = scmp.ne.s32.totalorder %s119, %s133
      %p135 = scmp.eq.s32.totalorder %s25, 0
      %p136 = por %p134, %p135
      %s137 = ssub.s32 %s26, %s38
      %s138 = ssub.s32 %s27, %s34
      %s139 = sor.u32 %s137, %s138
      %p140 = scmp.eq.s32.totalorder %s139, 0
      %s142 = sadd.s32 %s141, 1
      %s143 = scalar_select %p140, %s141, %s142
      %p146 = pneg %p140
      %p147 = scmp.eq.s32.totalorder %s19, 1
      %p148 = por %p146, %p147
      %p149 = scmp.ne.s32.totalorder %s141, %s144
      %p150 = scmp.eq.s32.totalorder %s19, 0
      %p151 = por %p149, %p150
      %p152 = scmp.ne.s32.totalorder %s141, %s144
      %p153 = scmp.eq.s32.totalorder %s24, 1
      %p154 = por %p152, %p153
      %p155 = scmp.ne.s32.totalorder %s144, %s145
      %p156 = scmp.eq.s32.totalorder %s24, 0
      %p157 = por %p155, %p156
      %p158 = scmp.ne.s32.totalorder %s144, %s145
      %p159 = scmp.eq.s32.totalorder %s25, 1
      %p160 = por %p158, %p159
      %p162 = scmp.ne.s32.totalorder %s145, %s161
      %p163 = scmp.eq.s32.totalorder %s25, 0
      %p164 = por %p162, %p163
      %p165 = scmp.le.s32.totalorder 1, %s19
      %p166 = scmp.lt.s32.totalorder %s19, 3
      %p167 = pnand %p165, %p166
      %p168 = pneg %p167
      // Predicated region
      $region9: #{tpu_custom_call.1} parent=5 // pred_check
        _
      $region10: #{tpu_custom_call.1} parent=5 // pred_check_branch
        %170 = sbr.rel (%p167) target = $region12
      $region11: #{tpu_custom_call.1} parent=5 // pred_region
        %s171 = ssub.s32 %s19, 1
        // Predicated region
        $region13: #{tpu_custom_call.1} parent=11 // pred_check
          %p172 = pneg %p108
        $region14: #{tpu_custom_call.1} parent=11 // pred_check_branch
          %174 = sbr.rel (%p172) target = $region16
        $region15: #{tpu_custom_call.1} parent=11 // pred_region
          %s176 = ssub.s32 128, 128
          %177 = vsyncadd [#allocation6], %s176
          %s179 = sshll.u32 [#allocation7], 4
          %s180 = int_to_ptr.vmem [resolvable:$true] %s179
          %182 = dma.hbm_to_vmem [thread:$0]  %s2, 128, %s180, [#allocation6]
        $region16: #{tpu_custom_call.1} parent=11 // pred_fallthru
          _
        // Predicated region
        $region17: #{tpu_custom_call.1} parent=11 // pred_check
          %p183 = pneg %p129
        $region18: #{tpu_custom_call.1} parent=11 // pred_check_branch
          %185 = sbr.rel (%p183) target = $region20
        $region19: #{tpu_custom_call.1} parent=11 // pred_region
          _
        $region20: #{tpu_custom_call.1} parent=11 // pred_fallthru
          _
      $region12: #{tpu_custom_call.1} parent=5 // pred_fallthru
        _
      %p186 = scmp.lt.s32.totalorder %s19, 2
      // Predicated region
      $region21: #{tpu_custom_call.1} parent=5 // pred_check
        %p187 = pneg %p186
      $region22: #{tpu_custom_call.1} parent=5 // pred_check_branch
        %189 = sbr.rel (%p187) target = $region24
      $region23: #{tpu_custom_call.1} parent=5 // pred_region
        // Predicated region
        $region25: #{tpu_custom_call.1} parent=23 // pred_check
          %p190 = pneg %p53
        $region26: #{tpu_custom_call.1} parent=23 // pred_check_branch
          %192 = sbr.rel (%p190) target = $region28
        $region27: #{tpu_custom_call.1} parent=23 // pred_region
          %s193 = sand.u32 %s43, 1
          %s194 = scalar_lea.sflag [#allocation3], %s193
          %s195 = sand.u32 %s43, 1
          %s196 = smul.addr %s195, 8
          %s197 = scalar_lea.vmem [#allocation2], %s196
          %s199 = ssub.s32 128, 128
          %200 = vsyncadd %s194, %s199
          %s201 = sadd.s32 %s27, %s26
          %s202 = smul.addr %s201, 128
          %s203 = scalar_lea.hbm %s0, %s202
          %s205 = sshll.u32 %s197, 4
          %s206 = int_to_ptr.vmem [resolvable:$true] %s205
          %208 = dma.hbm_to_vmem [thread:$0]  %s203, 128, %s206, %s194
        $region28: #{tpu_custom_call.1} parent=23 // pred_fallthru
          _
        // Predicated region
        $region29: #{tpu_custom_call.1} parent=23 // pred_check
          %p209 = pneg %p81
        $region30: #{tpu_custom_call.1} parent=23 // pred_check_branch
          %211 = sbr.rel (%p209) target = $region32
        $region31: #{tpu_custom_call.1} parent=23 // pred_region
          %s212 = sand.u32 %s19, 1
          %s213 = scalar_lea.sflag [#allocation6], %s212
          %s214 = sand.u32 %s71, 1
          %s215 = smul.addr %s214, 8
          %s216 = scalar_lea.vmem [#allocation5], %s215
          %s218 = ssub.s32 128, 128
          %219 = vsyncadd %s213, %s218
          %s220 = sadd.s32 %s27, %s26
          %s221 = smul.addr %s220, 128
          %s222 = scalar_lea.hbm %s1, %s221
          %s224 = sshll.u32 %s216, 4
          %s225 = int_to_ptr.vmem [resolvable:$true] %s224
          %227 = dma.hbm_to_vmem [thread:$0]  %s222, 128, %s225, %s213
        $region32: #{tpu_custom_call.1} parent=23 // pred_fallthru
          _
      $region24: #{tpu_custom_call.1} parent=5 // pred_fallthru
        _
      %p228 = scmp.le.s32.totalorder 1, %s19
      %p229 = scmp.lt.s32.totalorder %s19, 3
      %p230 = pnand %p228, %p229
      %p231 = pneg %p230
      // Predicated region
      $region33: #{tpu_custom_call.1} parent=5 // pred_check
        _
      $region34: #{tpu_custom_call.1} parent=5 // pred_check_branch
        %233 = sbr.rel (%p230) target = $region36
      $region35: #{tpu_custom_call.1} parent=5 // pred_region
        %s234 = ssub.s32 %s19, 1
        %s235 = sand.u32 %s46, 1
        %s236 = scalar_lea.sflag [#allocation3], %s235
        %s237 = sand.u32 %s46, 1
        %s238 = smul.addr %s237, 8
        %s239 = scalar_lea.vmem [#allocation2], %s238
        // Predicated region
        $region37: #{tpu_custom_call.1} parent=35 // pred_check
          %p240 = pneg %p59
        $region38: #{tpu_custom_call.1} parent=35 // pred_check_branch
          %242 = sbr.rel (%p240) target = $region40
        $region39: #{tpu_custom_call.1} parent=35 // pred_region
          %243 = dma.done %s236, 128
        $region40: #{tpu_custom_call.1} parent=35 // pred_fallthru
          _
        %s244 = sand.u32 %s24, 1
        %s245 = scalar_lea.sflag [#allocation6], %s244
        %s246 = sand.u32 %s74, 1
        %s247 = smul.addr %s246, 8
        %s248 = scalar_lea.vmem [#allocation5], %s247
        // Predicated region
        $region41: #{tpu_custom_call.1} parent=35 // pred_check
          %p249 = pneg %p87
        $region42: #{tpu_custom_call.1} parent=35 // pred_check_branch
          %251 = sbr.rel (%p249) target = $region44
        $region43: #{tpu_custom_call.1} parent=35 // pred_region
          %252 = dma.done %s245, 128
        $region44: #{tpu_custom_call.1} parent=35 // pred_fallthru
          _
        // Predicated region
        $region45: #{tpu_custom_call.1} parent=35 // pred_check
          %p253 = pneg %p108
        $region46: #{tpu_custom_call.1} parent=35 // pred_check_branch
          %255 = sbr.rel (%p253) target = $region48
        $region47: #{tpu_custom_call.1} parent=35 // pred_region
          %256 = dma.done [#allocation6], 128
        $region48: #{tpu_custom_call.1} parent=35 // pred_fallthru
          _
        %s257 = sand.u32 %s46, 1
        %s258 = scalar_lea.sflag [#allocation3], %s257
        %s259 = sand.u32 %s46, 1
        %s260 = smul.addr %s259, 8
        %s261 = scalar_lea.vmem [#allocation2], %s260
        %p262 = pneg %p59
        %p263 = pneg %p56
        %s264 = sand.u32 %s24, 1
        %s265 = scalar_lea.sflag [#allocation6], %s264
        %s266 = sand.u32 %s74, 1
        %s267 = smul.addr %s266, 8
        %s268 = scalar_lea.vmem [#allocation5], %s267
        %p269 = pneg %p87
        %p270 = pneg %p84
        %p271 = pneg %p108
        %p272 = pneg %p105
        %p273 = pneg %p129
        %p274 = pneg %p126
        %p275 = pneg %p157
        %p276 = pneg %p154
        %s277 = sand.u32 %s144, 1
        %s278 = scalar_lea.sflag [#allocation4], %s277
        %s279 = sand.u32 %s144, 1
        %s280 = smul.addr %s279, 8
        %s281 = scalar_lea.vmem [#allocation8], %s280
        %v282 = vld [vmem:[#allocation7] sm:$0xff]
        %v283 = vld [vmem:[%s239] sm:$0xff]
        %v284 = vld [vmem:[%s3] sm:$0xff]
        %v285 = vld [vmem:[%s248] sm:$0xff]
        %vm286 = vcmask 64512
        %v288 = vsel %vm286, %v284, 0
        %290 = vmatprep.subr.mxu0 0.0
        %291 = vmatpush1.msra.mxu0 %v285
        %292 = vmatprep.subr.mxu0 0.0
        %293 = vmatpush1.msra.mxu0 0.0
        %294 = vmatprep.subr.mxu0 0.0
        %295 = vmatpush1.msra.mxu0 0.0
        %296 = vmatprep.subr.mxu0 0.0
        %297 = vmatpush1.msra.mxu0 0.0
        %298 = vmatprep.subr.mxu0 0.0
        %299 = vmatpush1.msra.mxu0 0.0
        %300 = vmatprep.subr.mxu0 0.0
        %301 = vmatpush1.msra.mxu0 0.0
        %302 = vmatprep.subr.mxu0 0.0
        %303 = vmatpush1.msra.mxu0 0.0
        %304 = vmatprep.subr.mxu0 0.0
        %305 = vmatpush1.msra.mxu0 0.0
        %306 = vmatprep.subr.mxu0 0.0
        %307 = vmatpush1.msra.mxu0 0.0
        %308 = vmatprep.subr.mxu0 0.0
        %309 = vmatpush1.msra.mxu0 0.0
        %310 = vmatprep.subr.mxu0 0.0
        %311 = vmatpush1.msra.mxu0 0.0
        %312 = vmatprep.subr.mxu0 0.0
        %313 = vmatpush1.msra.mxu0 0.0
        %314 = vmatprep.subr.mxu0 0.0
        %315 = vmatpush1.msra.mxu0 0.0
        %316 = vmatprep.subr.mxu0 0.0
        %317 = vmatpush1.msra.mxu0 0.0
        %318 = vmatprep.subr.mxu0 0.0
        %319 = vmatpush1.msra.mxu0 0.0
        %320 = vmatprep.subr.mxu0 0.0
        %321 = vmatpush1.msra.mxu0 0.0
        %322 = vmatprep.subr.mxu0 0.0
        %323 = vmatpush1.msra.mxu0 0.0
        %324 = vmatprep.subr.mxu0 0.0
        %325 = vmatpush1.msra.mxu0 0.0
        %326 = vmatprep.subr.mxu0 0.0
        %327 = vmatpush1.msra.mxu0 0.0
        %328 = vmatprep.subr.mxu0 0.0
        %329 = vmatpush1.msra.mxu0 0.0
        %330 = vmatprep.subr.mxu0 0.0
        %331 = vmatpush1.msra.mxu0 0.0
        %332 = vmatprep.subr.mxu0 0.0
        %333 = vmatpush1.msra.mxu0 0.0
        %334 = vmatprep.subr.mxu0 0.0
        %335 = vmatpush1.msra.mxu0 0.0
        %336 = vmatprep.subr.mxu0 0.0
        %337 = vmatpush1.msra.mxu0 0.0
        %338 = vmatprep.subr.mxu0 0.0
        %339 = vmatpush1.msra.mxu0 0.0
        %340 = vmatprep.subr.mxu0 0.0
        %341 = vmatpush1.msra.mxu0 0.0
        %342 = vmatprep.subr.mxu0 0.0
        %343 = vmatpush1.msra.mxu0 0.0
        %344 = vmatprep.subr.mxu0 0.0
        %345 = vmatpush1.msra.mxu0 0.0
        %346 = vmatprep.subr.mxu0 0.0
        %347 = vmatpush1.msra.mxu0 0.0
        %348 = vmatprep.subr.mxu0 0.0
        %349 = vmatpush1.msra.mxu0 0.0
        %350 = vmatprep.subr.mxu0 0.0
        %351 = vmatpush1.msra.mxu0 0.0
        %352 = vmatprep.subr.mxu0 0.0
        %353 = vmatpush1.msra.mxu0 0.0
        %354 = vmatprep.mubr.f32.mxu0 0.0
        %355 = vmatmul.mubr.f32.gmra.mrb[0].mxu0 %v288
        %v356 = vpop.f32.mrb[0].mxu0
        %v357 = vadd.f32 0.0, %v356
        %v358 = vpop.f32.mrb[0].mxu0
        %359 = vdwg.mxu0
        %v361 = vsel %vm286, %v282, 0
        %363 = vmatprep.subr.mxu0 0.0
        %364 = vmatpush1.msra.mxu0 %v283
        %365 = vmatprep.subr.mxu0 0.0
        %366 = vmatpush1.msra.mxu0 0.0
        %367 = vmatprep.subr.mxu0 0.0
        %368 = vmatpush1.msra.mxu0 0.0
        %369 = vmatprep.subr.mxu0 0.0
        %370 = vmatpush1.msra.mxu0 0.0
        %371 = vmatprep.subr.mxu0 0.0
        %372 = vmatpush1.msra.mxu0 0.0
        %373 = vmatprep.subr.mxu0 0.0
        %374 = vmatpush1.msra.mxu0 0.0
        %375 = vmatprep.subr.mxu0 0.0
        %376 = vmatpush1.msra.mxu0 0.0
        %377 = vmatprep.subr.mxu0 0.0
        %378 = vmatpush1.msra.mxu0 0.0
        %379 = vmatprep.subr.mxu0 0.0
        %380 = vmatpush1.msra.mxu0 0.0
        %381 = vmatprep.subr.mxu0 0.0
        %382 = vmatpush1.msra.mxu0 0.0
        %383 = vmatprep.subr.mxu0 0.0
        %384 = vmatpush1.msra.mxu0 0.0
        %385 = vmatprep.subr.mxu0 0.0
        %386 = vmatpush1.msra.mxu0 0.0
        %387 = vmatprep.subr.mxu0 0.0
        %388 = vmatpush1.msra.mxu0 0.0
        %389 = vmatprep.subr.mxu0 0.0
        %390 = vmatpush1.msra.mxu0 0.0
        %391 = vmatprep.subr.mxu0 0.0
        %392 = vmatpush1.msra.mxu0 0.0
        %393 = vmatprep.subr.mxu0 0.0
        %394 = vmatpush1.msra.mxu0 0.0
        %395 = vmatprep.subr.mxu0 0.0
        %396 = vmatpush1.msra.mxu0 0.0
        %397 = vmatprep.subr.mxu0 0.0
        %398 = vmatpush1.msra.mxu0 0.0
        %399 = vmatprep.subr.mxu0 0.0
        %400 = vmatpush1.msra.mxu0 0.0
        %401 = vmatprep.subr.mxu0 0.0
        %402 = vmatpush1.msra.mxu0 0.0
        %403 = vmatprep.subr.mxu0 0.0
        %404 = vmatpush1.msra.mxu0 0.0
        %405 = vmatprep.subr.mxu0 0.0
        %406 = vmatpush1.msra.mxu0 0.0
        %407 = vmatprep.subr.mxu0 0.0
        %408 = vmatpush1.msra.mxu0 0.0
        %409 = vmatprep.subr.mxu0 0.0
        %410 = vmatpush1.msra.mxu0 0.0
        %411 = vmatprep.subr.mxu0 0.0
        %412 = vmatpush1.msra.mxu0 0.0
        %413 = vmatprep.subr.mxu0 0.0
        %414 = vmatpush1.msra.mxu0 0.0
        %415 = vmatprep.subr.mxu0 0.0
        %416 = vmatpush1.msra.mxu0 0.0
        %417 = vmatprep.subr.mxu0 0.0
        %418 = vmatpush1.msra.mxu0 0.0
        %419 = vmatprep.subr.mxu0 0.0
        %420 = vmatpush1.msra.mxu0 0.0
        %421 = vmatprep.subr.mxu0 0.0
        %422 = vmatpush1.msra.mxu0 0.0
        %423 = vmatprep.subr.mxu0 0.0
        %424 = vmatpush1.msra.mxu0 0.0
        %425 = vmatprep.subr.mxu0 0.0
        %426 = vmatpush1.msra.mxu0 0.0
        %427 = vmatprep.mubr.f32.mxu0 0.0
        %428 = vmatmul.mubr.f32.gmra.mrb[0].mxu0 %v361
        %v429 = vpop.f32.mrb[0].mxu0
        %v430 = vadd.f32 %v357, %v429
        %v431 = vpop.f32.mrb[0].mxu0
        %432 = vdwg.mxu0
        %433 = vst [vmem:[%s281] sm:$0xff] %v430
        %s434 = sand.u32 %s144, 1
        %s435 = scalar_lea.sflag [#allocation4], %s434
        %s436 = sand.u32 %s144, 1
        %s437 = smul.addr %s436, 8
        %s438 = scalar_lea.vmem [#allocation8], %s437
        // Predicated region
        $region49: #{tpu_custom_call.1} parent=35 // pred_check
          %p439 = pneg %p154
        $region50: #{tpu_custom_call.1} parent=35 // pred_check_branch
          %441 = sbr.rel (%p439) target = $region52
        $region51: #{tpu_custom_call.1} parent=35 // pred_region
          %s443 = ssub.s32 128, 128
          %444 = vsyncadd %s435, %s443
          %s445 = sadd.s32 %s29, %s28
          %s446 = smul.addr %s445, 128
          %s447 = scalar_lea.hbm %s4, %s446
          %s449 = sshll.u32 %s438, 4
          %s450 = int_to_ptr.vmem [resolvable:$true] %s449
          %452 = dma.vmem_to_hbm [thread:$0]  %s450, 128, %s447, %s435
        $region52: #{tpu_custom_call.1} parent=35 // pred_fallthru
          _
      $region36: #{tpu_custom_call.1} parent=5 // pred_fallthru
        _
      %p453 = scmp.le.s32.totalorder 2, %s19
      // Predicated region
      $region53: #{tpu_custom_call.1} parent=5 // pred_check
        %p454 = pneg %p453
      $region54: #{tpu_custom_call.1} parent=5 // pred_check_branch
        %456 = sbr.rel (%p454) target = $region56
      $region55: #{tpu_custom_call.1} parent=5 // pred_region
        %s457 = ssub.s32 %s19, 2
        // Predicated region
        $region57: #{tpu_custom_call.1} parent=55 // pred_check
          %p458 = pneg %p160
        $region58: #{tpu_custom_call.1} parent=55 // pred_check_branch
          %460 = sbr.rel (%p458) target = $region60
        $region59: #{tpu_custom_call.1} parent=55 // pred_region
          %s461 = sand.u32 %s145, 1
          %s462 = scalar_lea.sflag [#allocation4], %s461
          %s463 = sand.u32 %s145, 1
          %s464 = smul.addr %s463, 8
          %s465 = scalar_lea.vmem [#allocation8], %s464
          %466 = dma.done %s462, 128
        $region60: #{tpu_custom_call.1} parent=55 // pred_fallthru
          _
      $region56: #{tpu_custom_call.1} parent=5 // pred_fallthru
        _
    $region6: #{tpu_custom_call.1} parent=1 // loop_footer
      %s23 = sadd.s32 1, %s19
    $region7: #{tpu_custom_call.1} parent=1 // loop_footer_branch
      %18 = sbr.rel target = $region3
    $region8: #{tpu_custom_call.1} parent=1 // loop_exit
      _
    %467 = vsyncpa [#allocation3], 1
    %s468 = scalar_lea.sflag [#allocation3], 1
    %469 = vsyncpa %s468, 1
    %470 = vsyncpa [#allocation6], 1
    %s471 = scalar_lea.sflag [#allocation6], 1
    %472 = vsyncpa %s471, 1
    %473 = vsyncpa [#allocation4], 1
    %s474 = scalar_lea.sflag [#allocation4], 1
    %475 = vsyncpa %s474, 1

</llo_original>
